<compile_context>
chip_gen: v7x
topology: tpu7x:2x2x1
jax: 0.10.0
libtpu: 0.0.40
codegen_flags: <defaults>
</compile_context>

<pallas_src>
import jax
import jax.numpy as jnp
from jax.experimental import pallas as pl
from jax.experimental.pallas import tpu as pltpu


def _round_up(x, m):
    return (x + m - 1) // m * m


def _make_shift_kernel(tile, shift_pad):
    """Kernel producing one (channels, tile) lane-dense output time tile."""
    w = tile + shift_pad

    def kernel(off_ref, cur_ref, tail_ref, out_ref):
        # off_ref : (C,) int32 SMEM (scalar prefetch), off[c] < shift <= shift_pad
        # cur_ref : (C, tile)      VMEM, input window [t0, t0 + tile)
        # tail_ref: (C, shift_pad) VMEM, input window [t0 + tile, t0 + tile + shift_pad)
        # out_ref : (C, tile)      VMEM, out[c, j] = wav[c, t0 + j + off[c]]
        c_dim = out_ref.shape[0]

        def one_row(c):
            off_c = off_ref[c]                              # dynamic int32 scalar
            cur = cur_ref[pl.ds(c, 1), :]                   # (1, tile)
            tail = tail_ref[pl.ds(c, 1), :]                 # (1, shift_pad)
            window = jnp.concatenate([cur, tail], axis=1)   # (1, tile + shift_pad)
            # jnp.roll semantics: rolled[:, j] = window[:, (j - amt) % w]
            #                                  = window[:, (j + off_c) % w]
            amt = (w - off_c) % w
            rolled = pltpu.roll(window, amt, axis=1)        # one XLU lane rotate
            out_ref[pl.ds(c, 1), :] = rolled[:, :tile]      # direct row store

        if c_dim <= 16:
            for c in range(c_dim):                          # static unroll (small C)
                one_row(c)
        else:
            def body(c, carry):
                one_row(c)
                return carry
            jax.lax.fori_loop(0, c_dim, body, 0, unroll=2)

    return kernel


def _auto_tile(length, channels, shift_pad, itemsize):
    try:
        vmem_cap = int(pltpu.get_tpu_info().vmem_capacity_bytes)
    except Exception:  # conservative fallback (v7x has the smallest VMEM)
        vmem_cap = 64 * 1024 * 1024
    budget = vmem_cap // 2                      # >=50% headroom
    # residency ~ 2 * (2*tile + shift_pad) * channels * itemsize (double-buffered
    # cur + out blocks plus the small tail block).
    per_lane = max(1, channels * itemsize)
    max_tile = budget // (4 * per_lane) - shift_pad // 2
    max_tile = max(shift_pad, (max_tile // shift_pad) * shift_pad)
    # Target >= 8 grid steps (megacore split on v7x + DMA/compute/writeback
    # overlap everywhere); 512-2048-lane tiles already sit near the HBM
    # roofline, so there is no upside past ~16K lanes.
    want = -(-length // 8)
    want = -(-want // shift_pad) * shift_pad
    cap = max(shift_pad, (16384 // shift_pad) * shift_pad)
    return max(shift_pad, min(want, max_tile, cap))


def shift_channel_major(wav_cm, offsets, shift, *, tile=None):
    """Core kernel entry point on the lane-dense (channels, time) layout.

    Returns (channels, time - shift) with out[c, t] = wav_cm[c, t + offsets[c]].
    """
    channels, time = wav_cm.shape
    if shift <= 0:
        return wav_cm
    length = time - shift
    if length <= 0:
        raise ValueError("shift must be smaller than the time dimension")

    itemsize = jnp.dtype(wav_cm.dtype).itemsize
    shift_pad = _round_up(shift, 128)
    if tile is None:
        tile = _auto_tile(length, channels, shift_pad, itemsize)
    if tile < shift_pad or tile % shift_pad != 0:
        raise ValueError("tile must be a positive multiple of round_up(shift, 128)")

    nb = -(-length // tile)                 # number of output time tiles
    out_pad = nb * tile
    in_pad = out_pad + shift_pad            # room for the last tile's tail window
    # in_pad >= length + shift = time always, so the pad amount is non-negative.
    wav_p = jnp.pad(wav_cm, ((0, 0), (0, in_pad - time)))
    offsets = offsets.astype(jnp.int32)

    tail_blocks_per_tile = tile // shift_pad
    cur_spec = pl.BlockSpec((channels, tile), lambda i, off: (0, i))
    tail_spec = pl.BlockSpec((channels, shift_pad),
                             lambda i, off: (0, (i + 1) * tail_blocks_per_tile))
    out_spec = pl.BlockSpec((channels, tile), lambda i, off: (0, i))

    residency = 2 * (2 * tile + shift_pad) * channels * itemsize
    try:
        vmem_cap = int(pltpu.get_tpu_info().vmem_capacity_bytes)
    except Exception:
        vmem_cap = 64 * 1024 * 1024
    vmem_limit = int(min(max(4 * 1024 * 1024, 2 * residency), (vmem_cap * 3) // 4))

    out_cm = pl.pallas_call(
        _make_shift_kernel(tile, shift_pad),
        out_shape=jax.ShapeDtypeStruct((channels, out_pad), wav_cm.dtype),
        grid_spec=pltpu.PrefetchScalarGridSpec(
            num_scalar_prefetch=1,
            grid=(nb,),
            in_specs=[cur_spec, tail_spec],
            out_specs=out_spec,
        ),
        compiler_params=pltpu.CompilerParams(
            dimension_semantics=("parallel",),
            vmem_limit_bytes=vmem_limit,
        ),
    )(offsets, wav_p, wav_p)

    return out_cm[:, :length]


def shift_forward(wav, offsets, shift, training=True, *, tile=None):
    """Pallas equivalent of Shift.forward on the module's (time, channels) layout.

    wav:     (time, channels)
    offsets: (channels,) int32 in [0, shift) — functional stand-in for the
             in-module torch.randint draw.
    """
    time, channels = wav.shape
    if shift <= 0:
        return wav
    length = time - shift
    if not training:
        # NOTE: the original module does `wav[..., :length]` which on the
        # declared (time, channels) layout crops *channels*; the intended
        # behaviour (matching the training branch) is a crop along time.
        return wav[:length]
    # TODO(synk): avoid these two transpose passes by keeping the pipeline
    #             channel-major and calling shift_channel_major directly.
    out_cm = shift_channel_major(wav.T, offsets, shift, tile=tile)
    return out_cm.T


if __name__ == "__main__":
    key = jax.random.PRNGKey(0)
    k_wav, k_off1, k_off2 = jax.random.split(key, 3)

    time, channels = 1024, 4
    wav = jax.random.normal(k_wav, (time, channels), dtype=jnp.float32)

    # Config 1: automatic tile sizing -> 128-lane tiles, ~8-step parallel grid.
    shift1 = 96
    offsets1 = jax.random.randint(k_off1, (channels,), 0, shift1, dtype=jnp.int32)
    out1 = jax.block_until_ready(shift_forward(wav, offsets1, shift1, training=True))
    length1 = time - shift1
    idx1 = jnp.arange(length1)[:, None] + offsets1[None, :]
    ref1 = jnp.take_along_axis(wav, idx1, axis=0)
    assert out1.shape == (length1, channels) and out1.dtype == wav.dtype
    assert jnp.allclose(out1, ref1), "auto-tile kernel output mismatch vs reference"

    # Config 2: explicit tile (multiple of shift_pad); exercises the cur/tail
    # block boundary, padding and cropping.
    shift2 = 200
    offsets2 = jax.random.randint(k_off2, (channels,), 0, shift2, dtype=jnp.int32)
    out2 = jax.block_until_ready(
        shift_forward(wav, offsets2, shift2, training=True, tile=512))
    length2 = time - shift2
    idx2 = jnp.arange(length2)[:, None] + offsets2[None, :]
    ref2 = jnp.take_along_axis(wav, idx2, axis=0)
    assert out2.shape == (length2, channels) and out2.dtype == wav.dtype
    assert jnp.allclose(out2, ref2), "tiled kernel output mismatch vs reference"

    print("KERNEL_OK")
</pallas_src>

<mosaic_0001>
module attributes {stable_mosaic.version = 11 : i64} {
  func.func @kernel(%arg0: i32, %arg1: memref<4xi32, #tpu.memory_space<smem>>, %arg2: memref<4x128xf32, #tpu.memory_space<vmem>>, %arg3: memref<4x128xf32, #tpu.memory_space<vmem>>, %arg4: memref<4x128xf32, #tpu.memory_space<vmem>>) attributes {dimension_semantics = [#tpu.dimension_semantics<parallel>], iteration_bounds = array<i64: 8>, scalar_prefetch = 1 : i64, scratch_operands = 0 : i64, tpu.core_type = #tpu.core_type<tc>, window_params = [{transform_indices = @transform_0, window_bounds = array<i64: 4, 128>}, {transform_indices = @transform_1, window_bounds = array<i64: 4, 128>}, {transform_indices = @transform_2, window_bounds = array<i64: 4, 128>}]} {
    %c0 = arith.constant 0 : index
    %0 = memref.load %arg1[%c0] : memref<4xi32, #tpu.memory_space<smem>>
    %c0_0 = arith.constant 0 : index
    %c0_1 = arith.constant 0 : index
    %1 = vector.load %arg2[%c0_0, %c0_1] : memref<4x128xf32, #tpu.memory_space<vmem>>, vector<1x128xf32>
    %c0_2 = arith.constant 0 : index
    %c0_3 = arith.constant 0 : index
    %2 = vector.load %arg3[%c0_2, %c0_3] : memref<4x128xf32, #tpu.memory_space<vmem>>, vector<1x128xf32>
    %3 = tpu.concatenate %1, %2 in 1 : vector<1x128xf32>, vector<1x128xf32> -> vector<1x256xf32>
    %c256_i32 = arith.constant 256 : i32
    %4 = arith.subi %c256_i32, %0 : i32
    %c256_i32_4 = arith.constant 256 : i32
    %c0_i32 = arith.constant 0 : i32
    %5 = arith.cmpi eq, %c256_i32_4, %c0_i32 : i32
    %c1_i32 = arith.constant 1 : i32
    %6 = arith.select %5, %c1_i32, %c256_i32_4 : i32
    %7 = arith.remsi %4, %6 : i32
    %c0_i32_5 = arith.constant 0 : i32
    %8 = arith.cmpi ne, %7, %c0_i32_5 : i32
    %c0_i32_6 = arith.constant 0 : i32
    %9 = arith.cmpi slt, %7, %c0_i32_6 : i32
    %c0_i32_7 = arith.constant 0 : i32
    %10 = arith.cmpi slt, %6, %c0_i32_7 : i32
    %11 = arith.xori %9, %10 : i1
    %12 = arith.andi %11, %8 : i1
    %13 = arith.addi %7, %6 : i32
    %14 = arith.select %12, %13, %7 : i32
    %15 = tpu.dynamic_rotate %3 by %14 dim 1 : vector<1x256xf32>, i32 -> vector<1x256xf32>
    %16 = vector.extract_strided_slice %15 {offsets = [0, 0], sizes = [1, 128], strides = [1, 1]} : vector<1x256xf32> to vector<1x128xf32>
    %c0_8 = arith.constant 0 : index
    %c0_9 = arith.constant 0 : index
    %17 = vector.load %arg4[%c0_8, %c0_9] : memref<4x128xf32, #tpu.memory_space<vmem>>, vector<1x128xf32>
    tpu.vector_store %arg4[%c0_8, %c0_9], %16 {strides = array<i32>} : memref<4x128xf32, #tpu.memory_space<vmem>>, vector<1x128xf32>,
    %c1 = arith.constant 1 : index
    %18 = memref.load %arg1[%c1] : memref<4xi32, #tpu.memory_space<smem>>
    %c1_10 = arith.constant 1 : index
    %c0_11 = arith.constant 0 : index
    %19 = vector.load %arg2[%c1_10, %c0_11] : memref<4x128xf32, #tpu.memory_space<vmem>>, vector<1x128xf32>
    %c1_12 = arith.constant 1 : index
    %c0_13 = arith.constant 0 : index
    %20 = vector.load %arg3[%c1_12, %c0_13] : memref<4x128xf32, #tpu.memory_space<vmem>>, vector<1x128xf32>
    %21 = tpu.concatenate %19, %20 in 1 : vector<1x128xf32>, vector<1x128xf32> -> vector<1x256xf32>
    %c256_i32_14 = arith.constant 256 : i32
    %22 = arith.subi %c256_i32_14, %18 : i32
    %c256_i32_15 = arith.constant 256 : i32
    %c0_i32_16 = arith.constant 0 : i32
    %23 = arith.cmpi eq, %c256_i32_15, %c0_i32_16 : i32
    %c1_i32_17 = arith.constant 1 : i32
    %24 = arith.select %23, %c1_i32_17, %c256_i32_15 : i32
    %25 = arith.remsi %22, %24 : i32
    %c0_i32_18 = arith.constant 0 : i32
    %26 = arith.cmpi ne, %25, %c0_i32_18 : i32
    %c0_i32_19 = arith.constant 0 : i32
    %27 = arith.cmpi slt, %25, %c0_i32_19 : i32
    %c0_i32_20 = arith.constant 0 : i32
    %28 = arith.cmpi slt, %24, %c0_i32_20 : i32
    %29 = arith.xori %27, %28 : i1
    %30 = arith.andi %29, %26 : i1
    %31 = arith.addi %25, %24 : i32
    %32 = arith.select %30, %31, %25 : i32
    %33 = tpu.dynamic_rotate %21 by %32 dim 1 : vector<1x256xf32>, i32 -> vector<1x256xf32>
    %34 = vector.extract_strided_slice %33 {offsets = [0, 0], sizes = [1, 128], strides = [1, 1]} : vector<1x256xf32> to vector<1x128xf32>
    %c1_21 = arith.constant 1 : index
    %c0_22 = arith.constant 0 : index
    %35 = vector.load %arg4[%c1_21, %c0_22] : memref<4x128xf32, #tpu.memory_space<vmem>>, vector<1x128xf32>
    tpu.vector_store %arg4[%c1_21, %c0_22], %34 {strides = array<i32>} : memref<4x128xf32, #tpu.memory_space<vmem>>, vector<1x128xf32>,
    %c2 = arith.constant 2 : index
    %36 = memref.load %arg1[%c2] : memref<4xi32, #tpu.memory_space<smem>>
    %c2_23 = arith.constant 2 : index
    %c0_24 = arith.constant 0 : index
    %37 = vector.load %arg2[%c2_23, %c0_24] : memref<4x128xf32, #tpu.memory_space<vmem>>, vector<1x128xf32>
    %c2_25 = arith.constant 2 : index
    %c0_26 = arith.constant 0 : index
    %38 = vector.load %arg3[%c2_25, %c0_26] : memref<4x128xf32, #tpu.memory_space<vmem>>, vector<1x128xf32>
    %39 = tpu.concatenate %37, %38 in 1 : vector<1x128xf32>, vector<1x128xf32> -> vector<1x256xf32>
    %c256_i32_27 = arith.constant 256 : i32
    %40 = arith.subi %c256_i32_27, %36 : i32
    %c256_i32_28 = arith.constant 256 : i32
    %c0_i32_29 = arith.constant 0 : i32
    %41 = arith.cmpi eq, %c256_i32_28, %c0_i32_29 : i32
    %c1_i32_30 = arith.constant 1 : i32
    %42 = arith.select %41, %c1_i32_30, %c256_i32_28 : i32
    %43 = arith.remsi %40, %42 : i32
    %c0_i32_31 = arith.constant 0 : i32
    %44 = arith.cmpi ne, %43, %c0_i32_31 : i32
    %c0_i32_32 = arith.constant 0 : i32
    %45 = arith.cmpi slt, %43, %c0_i32_32 : i32
    %c0_i32_33 = arith.constant 0 : i32
    %46 = arith.cmpi slt, %42, %c0_i32_33 : i32
    %47 = arith.xori %45, %46 : i1
    %48 = arith.andi %47, %44 : i1
    %49 = arith.addi %43, %42 : i32
    %50 = arith.select %48, %49, %43 : i32
    %51 = tpu.dynamic_rotate %39 by %50 dim 1 : vector<1x256xf32>, i32 -> vector<1x256xf32>
    %52 = vector.extract_strided_slice %51 {offsets = [0, 0], sizes = [1, 128], strides = [1, 1]} : vector<1x256xf32> to vector<1x128xf32>
    %c2_34 = arith.constant 2 : index
    %c0_35 = arith.constant 0 : index
    %53 = vector.load %arg4[%c2_34, %c0_35] : memref<4x128xf32, #tpu.memory_space<vmem>>, vector<1x128xf32>
    tpu.vector_store %arg4[%c2_34, %c0_35], %52 {strides = array<i32>} : memref<4x128xf32, #tpu.memory_space<vmem>>, vector<1x128xf32>,
    %c3 = arith.constant 3 : index
    %54 = memref.load %arg1[%c3] : memref<4xi32, #tpu.memory_space<smem>>
    %c3_36 = arith.constant 3 : index
    %c0_37 = arith.constant 0 : index
    %55 = vector.load %arg2[%c3_36, %c0_37] : memref<4x128xf32, #tpu.memory_space<vmem>>, vector<1x128xf32>
    %c3_38 = arith.constant 3 : index
    %c0_39 = arith.constant 0 : index
    %56 = vector.load %arg3[%c3_38, %c0_39] : memref<4x128xf32, #tpu.memory_space<vmem>>, vector<1x128xf32>
    %57 = tpu.concatenate %55, %56 in 1 : vector<1x128xf32>, vector<1x128xf32> -> vector<1x256xf32>
    %c256_i32_40 = arith.constant 256 : i32
    %58 = arith.subi %c256_i32_40, %54 : i32
    %c256_i32_41 = arith.constant 256 : i32
    %c0_i32_42 = arith.constant 0 : i32
    %59 = arith.cmpi eq, %c256_i32_41, %c0_i32_42 : i32
    %c1_i32_43 = arith.constant 1 : i32
    %60 = arith.select %59, %c1_i32_43, %c256_i32_41 : i32
    %61 = arith.remsi %58, %60 : i32
    %c0_i32_44 = arith.constant 0 : i32
    %62 = arith.cmpi ne, %61, %c0_i32_44 : i32
    %c0_i32_45 = arith.constant 0 : i32
    %63 = arith.cmpi slt, %61, %c0_i32_45 : i32
    %c0_i32_46 = arith.constant 0 : i32
    %64 = arith.cmpi slt, %60, %c0_i32_46 : i32
    %65 = arith.xori %63, %64 : i1
    %66 = arith.andi %65, %62 : i1
    %67 = arith.addi %61, %60 : i32
    %68 = arith.select %66, %67, %61 : i32
    %69 = tpu.dynamic_rotate %57 by %68 dim 1 : vector<1x256xf32>, i32 -> vector<1x256xf32>
    %70 = vector.extract_strided_slice %69 {offsets = [0, 0], sizes = [1, 128], strides = [1, 1]} : vector<1x256xf32> to vector<1x128xf32>
    %c3_47 = arith.constant 3 : index
    %c0_48 = arith.constant 0 : index
    %71 = vector.load %arg4[%c3_47, %c0_48] : memref<4x128xf32, #tpu.memory_space<vmem>>, vector<1x128xf32>
    tpu.vector_store %arg4[%c3_47, %c0_48], %70 {strides = array<i32>} : memref<4x128xf32, #tpu.memory_space<vmem>>, vector<1x128xf32>,
    return
  }
  func.func @transform_0(%arg0: i32, %arg1: memref<4xi32, #tpu.memory_space<smem>>) -> (i32, i32) {
    %c0_i32 = arith.constant 0 : i32
    %c0_i32_0 = arith.constant 0 : i32
    return %c0_i32, %arg0 : i32, i32
  }
  func.func @transform_1(%arg0: i32, %arg1: memref<4xi32, #tpu.memory_space<smem>>) -> (i32, i32) {
    %c1_i32 = arith.constant 1 : i32
    %0 = arith.addi %arg0, %c1_i32 : i32
    %c1_i32_0 = arith.constant 1 : i32
    %1 = arith.muli %0, %c1_i32_0 : i32
    %c0_i32 = arith.constant 0 : i32
    %c0_i32_1 = arith.constant 0 : i32
    return %c0_i32, %1 : i32, i32
  }
  func.func @transform_2(%arg0: i32, %arg1: memref<4xi32, #tpu.memory_space<smem>>) -> (i32, i32) {
    %c0_i32 = arith.constant 0 : i32
    %c0_i32_0 = arith.constant 0 : i32
    return %c0_i32, %arg0 : i32, i32
  }
}

</mosaic_0001>

<llo_original>
// kernel: tpu_custom_call.1
$region0: #{tpu_custom_call.1}
  #allocation0 [shape = 'u32[]', space=smem, size = 0x4, offset = 0x4, fixed_abs, tag = 'smem constant byte address 0x4 - core index']
  #allocation1 [shape = 'u32[144,128]{1,0:T(1,128)}', space=vmem, size = 0x12000, scoped, tag = 'internal scratch']
  #allocation2 [shape = 's32[1]{0}', space=sflag, size = 0x4, scoped, tag = 'scoped memory for tpu_custom_call.1']
  #allocation3 [shape = 'u8[512]{0}', space=smem, size = 0x200, scoped, tag = 'prefetched SMEM operand 0']
  %s0 = inlined_call_operand.hbm [shape: s32[4], index: 0, kind: input, shape index: {}]
  %s1 = inlined_call_operand.hbm [shape: f32[4,1152], index: 1, kind: input, shape index: {}]
  %s2 = inlined_call_operand.hbm [shape: f32[4,1152], index: 2, kind: input, shape index: {}]
  %s3 = inlined_call_operand.hbm [shape: f32[4,1024], index: 3, kind: output, shape index: {}]
  %s4 = sld [smem:[#allocation0]]
  $region49: #{tpu_custom_call.1} parent=0
    _
  %s6 = ssub.s32 1, %s4
  %s7 = scalar_select 0, %s6, %s4
  %9 = dma.hbm_to_smem %s0, 16, [#allocation3], [#allocation2]
  %10 = dma.done [#allocation2], 16
  %11 = sfence
  $region1: #{tpu_custom_call.1} parent=0
    #allocation4 [shape = 'u8[4096]{0}', space=vmem, size = 0x1000, scoped, tag = 'input window, operand 1']
    #allocation5 [shape = 's32[2]{0}', space=sflag, size = 0x8, scoped, tag = 'scoped memory for tpu_custom_call.1']
    #allocation6 [shape = 's32[2]{0}', space=sflag, size = 0x8, scoped, tag = 'scoped memory for tpu_custom_call.1']
    #allocation7 [shape = 'u8[4096]{0}', space=vmem, size = 0x1000, scoped, tag = 'input window, operand 2']
    #allocation8 [shape = 's32[2]{0}', space=sflag, size = 0x8, scoped, tag = 'scoped memory for tpu_custom_call.1']
    #allocation9 [shape = 'u8[4096]{0}', space=vmem, size = 0x1000, scoped, tag = 'output window, operand 0']
    %12 = vsyncpa [#allocation5], 0
    %s13 = scalar_lea.sflag [#allocation5], 1
    %14 = vsyncpa %s13, 0
    %15 = vsyncpa [#allocation8], 0
    %s16 = scalar_lea.sflag [#allocation8], 1
    %17 = vsyncpa %s16, 0
    %18 = vsyncpa [#allocation6], 0
    %s19 = scalar_lea.sflag [#allocation6], 1
    %20 = vsyncpa %s19, 0
    loop: start=0, step=1, limit=10
    $region2: #{tpu_custom_call.1} parent=1 // loop_pre_header
      _
    $region3: #{tpu_custom_call.1} parent=1 // loop_header
      %s22 = sphi 0, %s26
      %p23 = scmp.ge.s32.totalorder %s22, 10
      %s32 = sphi 0, %s34
      %s35 = sphi 0, %s32
      %s36 = sphi 0, %s35
      %s52 = sphi 0, %s36
      %s60 = sphi 0, %s62
      %s63 = sphi 0, %s60
      %s64 = sphi 0, %s63
      %s80 = sphi 0, %s64
      %s86 = sphi 0, %s88
      %s89 = sphi 0, %s86
      %s90 = sphi 0, %s89
      %s106 = sphi 0, %s90
    $region4: #{tpu_custom_call.1} parent=1 // loop_header_branch
      %25 = sbr.rel (%p23) target = $region8
    $region5: #{tpu_custom_call.1} parent=1 // loop_body
      %s27 = ssub.s32 %s22, 1
      %s28 = ssub.s32 %s22, 2
      %s29 = sadd.s32 %s22, 1
      %s30 = ssub.s32 %s22, %s29
      %p31 = scmp.eq.s32.totalorder %s30, 0
      %s33 = sadd.s32 %s32, 1
      %s34 = scalar_select %p31, %s32, %s33
      %p37 = pneg %p31
      %p38 = scmp.eq.s32.totalorder %s22, 7
      %p39 = por %p37, %p38
      %p40 = scmp.ne.s32.totalorder %s32, %s35
      %p41 = scmp.eq.s32.totalorder %s22, 0
      %p42 = por %p40, %p41
      %p43 = scmp.ne.s32.totalorder %s32, %s35
      %p44 = scmp.eq.s32.totalorder %s27, 7
      %p45 = por %p43, %p44
      %p46 = scmp.ne.s32.totalorder %s35, %s36
      %p47 = scmp.eq.s32.totalorder %s27, 0
      %p48 = por %p46, %p47
      %p49 = scmp.ne.s32.totalorder %s35, %s36
      %p50 = scmp.eq.s32.totalorder %s28, 7
      %p51 = por %p49, %p50
      %p53 = scmp.ne.s32.totalorder %s36, %s52
      %p54 = scmp.eq.s32.totalorder %s28, 0
      %p55 = por %p53, %p54
      %s56 = sadd.s32 %s22, 1
      %s57 = sadd.s32 %s29, 1
      %s58 = ssub.s32 %s56, %s57
      %p59 = scmp.eq.s32.totalorder %s58, 0
      %s61 = sadd.s32 %s60, 1
      %s62 = scalar_select %p59, %s60, %s61
      %p65 = pneg %p59
      %p66 = scmp.eq.s32.totalorder %s22, 7
      %p67 = por %p65, %p66
      %p68 = scmp.ne.s32.totalorder %s60, %s63
      %p69 = scmp.eq.s32.totalorder %s22, 0
      %p70 = por %p68, %p69
      %p71 = scmp.ne.s32.totalorder %s60, %s63
      %p72 = scmp.eq.s32.totalorder %s27, 7
      %p73 = por %p71, %p72
      %p74 = scmp.ne.s32.totalorder %s63, %s64
      %p75 = scmp.eq.s32.totalorder %s27, 0
      %p76 = por %p74, %p75
      %p77 = scmp.ne.s32.totalorder %s63, %s64
      %p78 = scmp.eq.s32.totalorder %s28, 7
      %p79 = por %p77, %p78
      %p81 = scmp.ne.s32.totalorder %s64, %s80
      %p82 = scmp.eq.s32.totalorder %s28, 0
      %p83 = por %p81, %p82
      %s84 = ssub.s32 %s22, %s29
      %p85 = scmp.eq.s32.totalorder %s84, 0
      %s87 = sadd.s32 %s86, 1
      %s88 = scalar_select %p85, %s86, %s87
      %p91 = pneg %p85
      %p92 = scmp.eq.s32.totalorder %s22, 7
      %p93 = por %p91, %p92
      %p94 = scmp.ne.s32.totalorder %s86, %s89
      %p95 = scmp.eq.s32.totalorder %s22, 0
      %p96 = por %p94, %p95
      %p97 = scmp.ne.s32.totalorder %s86, %s89
      %p98 = scmp.eq.s32.totalorder %s27, 7
      %p99 = por %p97, %p98
      %p100 = scmp.ne.s32.totalorder %s89, %s90
      %p101 = scmp.eq.s32.totalorder %s27, 0
      %p102 = por %p100, %p101
      %p103 = scmp.ne.s32.totalorder %s89, %s90
      %p104 = scmp.eq.s32.totalorder %s28, 7
      %p105 = por %p103, %p104
      %p107 = scmp.ne.s32.totalorder %s90, %s106
      %p108 = scmp.eq.s32.totalorder %s28, 0
      %p109 = por %p107, %p108
      %p110 = scmp.le.s32.totalorder 1, %s22
      %p111 = scmp.lt.s32.totalorder %s22, 9
      %p112 = pnand %p110, %p111
      %p113 = pneg %p112
      // Predicated region
      $region9: #{tpu_custom_call.1} parent=5 // pred_check
        _
      $region10: #{tpu_custom_call.1} parent=5 // pred_check_branch
        %115 = sbr.rel (%p112) target = $region12
      $region11: #{tpu_custom_call.1} parent=5 // pred_region
        %s116 = ssub.s32 %s22, 1
      $region12: #{tpu_custom_call.1} parent=5 // pred_fallthru
        _
      %p117 = scmp.lt.s32.totalorder %s22, 8
      // Predicated region
      $region13: #{tpu_custom_call.1} parent=5 // pred_check
        %p118 = pneg %p117
      $region14: #{tpu_custom_call.1} parent=5 // pred_check_branch
        %120 = sbr.rel (%p118) target = $region16
      $region15: #{tpu_custom_call.1} parent=5 // pred_region
        // Predicated region
        $region17: #{tpu_custom_call.1} parent=15 // pred_check
          %p121 = pneg %p42
        $region18: #{tpu_custom_call.1} parent=15 // pred_check_branch
          %123 = sbr.rel (%p121) target = $region20
        $region19: #{tpu_custom_call.1} parent=15 // pred_region
          %s124 = sand.u32 %s32, 1
          %s125 = scalar_lea.sflag [#allocation5], %s124
          %s126 = sand.u32 %s32, 1
          %s127 = smul.addr %s126, 4
          %s128 = scalar_lea.vmem [#allocation4], %s127
          %s130 = ssub.s32 64, 64
          %131 = vsyncadd %s125, %s130
          %s132 = smul.addr %s22, 64
          %s133 = scalar_lea.hbm %s1, %s132
          %s135 = sshll.u32 %s128, 4
          %s136 = int_to_ptr.vmem [resolvable:$true] %s135
          %138 = dma.hbm_to_vmem [thread:$0]  %s133, 64, %s136, %s125
        $region20: #{tpu_custom_call.1} parent=15 // pred_fallthru
          _
        // Predicated region
        $region21: #{tpu_custom_call.1} parent=15 // pred_check
          %p139 = pneg %p70
        $region22: #{tpu_custom_call.1} parent=15 // pred_check_branch
          %141 = sbr.rel (%p139) target = $region24
        $region23: #{tpu_custom_call.1} parent=15 // pred_region
          %s142 = sand.u32 %s60, 1
          %s143 = scalar_lea.sflag [#allocation8], %s142
          %s144 = sand.u32 %s60, 1
          %s145 = smul.addr %s144, 4
          %s146 = scalar_lea.vmem [#allocation7], %s145
          %s147 = sadd.s32 %s22, 1
          %s149 = ssub.s32 64, 64
          %150 = vsyncadd %s143, %s149
          %s151 = smul.addr %s147, 64
          %s152 = scalar_lea.hbm %s2, %s151
          %s154 = sshll.u32 %s146, 4
          %s155 = int_to_ptr.vmem [resolvable:$true] %s154
          %157 = dma.hbm_to_vmem [thread:$0]  %s152, 64, %s155, %s143
        $region24: #{tpu_custom_call.1} parent=15 // pred_fallthru
          _
      $region16: #{tpu_custom_call.1} parent=5 // pred_fallthru
        _
      %p158 = scmp.le.s32.totalorder 1, %s22
      %p159 = scmp.lt.s32.totalorder %s22, 9
      %p160 = pnand %p158, %p159
      %p161 = pneg %p160
      // Predicated region
      $region25: #{tpu_custom_call.1} parent=5 // pred_check
        _
      $region26: #{tpu_custom_call.1} parent=5 // pred_check_branch
        %163 = sbr.rel (%p160) target = $region28
      $region27: #{tpu_custom_call.1} parent=5 // pred_region
        %s164 = ssub.s32 %s22, 1
        %s165 = sand.u32 %s35, 1
        %s166 = scalar_lea.sflag [#allocation5], %s165
        %s167 = sand.u32 %s35, 1
        %s168 = smul.addr %s167, 4
        %s169 = scalar_lea.vmem [#allocation4], %s168
        // Predicated region
        $region29: #{tpu_custom_call.1} parent=27 // pred_check
          %p170 = pneg %p48
        $region30: #{tpu_custom_call.1} parent=27 // pred_check_branch
          %172 = sbr.rel (%p170) target = $region32
        $region31: #{tpu_custom_call.1} parent=27 // pred_region
          %173 = dma.done %s166, 64
        $region32: #{tpu_custom_call.1} parent=27 // pred_fallthru
          _
        %s174 = sand.u32 %s63, 1
        %s175 = scalar_lea.sflag [#allocation8], %s174
        %s176 = sand.u32 %s63, 1
        %s177 = smul.addr %s176, 4
        %s178 = scalar_lea.vmem [#allocation7], %s177
        // Predicated region
        $region33: #{tpu_custom_call.1} parent=27 // pred_check
          %p179 = pneg %p76
        $region34: #{tpu_custom_call.1} parent=27 // pred_check_branch
          %181 = sbr.rel (%p179) target = $region36
        $region35: #{tpu_custom_call.1} parent=27 // pred_region
          %182 = dma.done %s175, 64
        $region36: #{tpu_custom_call.1} parent=27 // pred_fallthru
          _
        %s183 = sand.u32 %s35, 1
        %s184 = scalar_lea.sflag [#allocation5], %s183
        %s185 = sand.u32 %s35, 1
        %s186 = smul.addr %s185, 4
        %s187 = scalar_lea.vmem [#allocation4], %s186
        %p188 = pneg %p48
        %p189 = pneg %p45
        %s190 = sand.u32 %s63, 1
        %s191 = scalar_lea.sflag [#allocation8], %s190
        %s192 = sand.u32 %s63, 1
        %s193 = smul.addr %s192, 4
        %s194 = scalar_lea.vmem [#allocation7], %s193
        %p195 = pneg %p76
        %p196 = pneg %p73
        %p197 = pneg %p102
        %p198 = pneg %p99
        %s199 = sand.u32 %s89, 1
        %s200 = scalar_lea.sflag [#allocation6], %s199
        %s201 = sand.u32 %s89, 1
        %s202 = smul.addr %s201, 4
        %s203 = scalar_lea.vmem [#allocation9], %s202
        %s204 = sadd.s32 %s27, 1
        %s205 = sld [smem:[#allocation3]]
        %v206 = vld [vmem:[%s169] sm:$0x1]
        %v207 = vld [vmem:[%s178] sm:$0x1]
        %s208 = ssub.s32 256, %s205
        %p209 = scmp.lt.s32.totalorder %s208, 0
        %s210 = ssub.s32 0, %s208
        %s211 = scalar_select %p209, %s210, %s208
        %s212 = sand.u32 %s211, 255
        %s213 = ssub.s32 0, %s212
        %s214 = scalar_select %p209, %s213, %s212
        %p215 = scmp.ne.s32.totalorder %s214, 0
        %p216 = scmp.lt.s32.totalorder %s214, 0
        %p217 = pnand %p216, %p215
        %p218 = pneg %p217
        %s219 = sadd.s32 %s214, 256
        %s220 = scalar_select %p218, %s219, %s214
        %s221 = sand.u32 %s220, 255
        %s222 = sand.u32 %s221, 127
        %s223 = sshrl.u32 %s221, 7
        %224 = vrot.lane.b32.xlu0 %v206, %s222
        %v225 = vpop.permute.xlu0 %224
        %226 = vrot.lane.b32.xlu0 %v207, %s222
        %v227 = vpop.permute.xlu0 %226
        %v228 = vstv %s222
        %v229 = vlaneseq
        %v230 = vand.u32 %v229, 127
        %vm231 = vcmp.lt.s32.totalorder %v230, %v228
        %v232 = vsel %vm231, %v225, %v227
        %v233 = vsel %vm231, %v227, %v225
        %s234 = sand.u32 %s223, 1
        %v235 = vstv %s234
        %vm236 = vcmp.ne.s32.totalorder %v235, 0
        %v237 = vsel %vm236, %v232, %v233
        %238 = vst [vmem:[%s203] sm:$0x1] %v237
        %s239 = sld [smem:[#allocation3 + $0x1]]
        %v240 = vld [vmem:[%s169 + $0x1] sm:$0x1]
        %v241 = vld [vmem:[%s178 + $0x1] sm:$0x1]
        %s242 = ssub.s32 256, %s239
        %p243 = scmp.lt.s32.totalorder %s242, 0
        %s244 = ssub.s32 0, %s242
        %s245 = scalar_select %p243, %s244, %s242
        %s246 = sand.u32 %s245, 255
        %s247 = ssub.s32 0, %s246
        %s248 = scalar_select %p243, %s247, %s246
        %p249 = scmp.ne.s32.totalorder %s248, 0
        %p250 = scmp.lt.s32.totalorder %s248, 0
        %p251 = pnand %p250, %p249
        %p252 = pneg %p251
        %s253 = sadd.s32 %s248, 256
        %s254 = scalar_select %p252, %s253, %s248
        %s255 = sand.u32 %s254, 255
        %s256 = sand.u32 %s255, 127
        %s257 = sshrl.u32 %s255, 7
        %258 = vrot.lane.b32.xlu0 %v240, %s256
        %v259 = vpop.permute.xlu0 %258
        %260 = vrot.lane.b32.xlu0 %v241, %s256
        %v261 = vpop.permute.xlu0 %260
        %v262 = vstv %s256
        %vm263 = vcmp.lt.s32.totalorder %v230, %v262
        %v264 = vsel %vm263, %v259, %v261
        %v265 = vsel %vm263, %v261, %v259
        %s266 = sand.u32 %s257, 1
        %v267 = vstv %s266
        %vm268 = vcmp.ne.s32.totalorder %v267, 0
        %v269 = vsel %vm268, %v264, %v265
        %270 = vst [vmem:[%s203 + $0x1] sm:$0x1] %v269
        %s271 = sld [smem:[#allocation3 + $0x2]]
        %v272 = vld [vmem:[%s169 + $0x2] sm:$0x1]
        %v273 = vld [vmem:[%s178 + $0x2] sm:$0x1]
        %s274 = ssub.s32 256, %s271
        %p275 = scmp.lt.s32.totalorder %s274, 0
        %s276 = ssub.s32 0, %s274
        %s277 = scalar_select %p275, %s276, %s274
        %s278 = sand.u32 %s277, 255
        %s279 = ssub.s32 0, %s278
        %s280 = scalar_select %p275, %s279, %s278
        %p281 = scmp.ne.s32.totalorder %s280, 0
        %p282 = scmp.lt.s32.totalorder %s280, 0
        %p283 = pnand %p282, %p281
        %p284 = pneg %p283
        %s285 = sadd.s32 %s280, 256
        %s286 = scalar_select %p284, %s285, %s280
        %s287 = sand.u32 %s286, 255
        %s288 = sand.u32 %s287, 127
        %s289 = sshrl.u32 %s287, 7
        %290 = vrot.lane.b32.xlu0 %v272, %s288
        %v291 = vpop.permute.xlu0 %290
        %292 = vrot.lane.b32.xlu0 %v273, %s288
        %v293 = vpop.permute.xlu0 %292
        %v294 = vstv %s288
        %vm295 = vcmp.lt.s32.totalorder %v230, %v294
        %v296 = vsel %vm295, %v291, %v293
        %v297 = vsel %vm295, %v293, %v291
        %s298 = sand.u32 %s289, 1
        %v299 = vstv %s298
        %vm300 = vcmp.ne.s32.totalorder %v299, 0
        %v301 = vsel %vm300, %v296, %v297
        %302 = vst [vmem:[%s203 + $0x2] sm:$0x1] %v301
        %s303 = sld [smem:[#allocation3 + $0x3]]
        %v304 = vld [vmem:[%s169 + $0x3] sm:$0x1]
        %v305 = vld [vmem:[%s178 + $0x3] sm:$0x1]
        %s306 = ssub.s32 256, %s303
        %p307 = scmp.lt.s32.totalorder %s306, 0
        %s308 = ssub.s32 0, %s306
        %s309 = scalar_select %p307, %s308, %s306
        %s310 = sand.u32 %s309, 255
        %s311 = ssub.s32 0, %s310
        %s312 = scalar_select %p307, %s311, %s310
        %p313 = scmp.ne.s32.totalorder %s312, 0
        %p314 = scmp.lt.s32.totalorder %s312, 0
        %p315 = pnand %p314, %p313
        %p316 = pneg %p315
        %s317 = sadd.s32 %s312, 256
        %s318 = scalar_select %p316, %s317, %s312
        %s319 = sand.u32 %s318, 255
        %s320 = sand.u32 %s319, 127
        %s321 = sshrl.u32 %s319, 7
        %322 = vrot.lane.b32.xlu0 %v304, %s320
        %v323 = vpop.permute.xlu0 %322
        %324 = vrot.lane.b32.xlu0 %v305, %s320
        %v325 = vpop.permute.xlu0 %324
        %v326 = vstv %s320
        %vm327 = vcmp.lt.s32.totalorder %v230, %v326
        %v328 = vsel %vm327, %v323, %v325
        %v329 = vsel %vm327, %v325, %v323
        %s330 = sand.u32 %s321, 1
        %v331 = vstv %s330
        %vm332 = vcmp.ne.s32.totalorder %v331, 0
        %v333 = vsel %vm332, %v328, %v329
        %334 = vst [vmem:[%s203 + $0x3] sm:$0x1] %v333
        %s335 = sand.u32 %s89, 1
        %s336 = scalar_lea.sflag [#allocation6], %s335
        %s337 = sand.u32 %s89, 1
        %s338 = smul.addr %s337, 4
        %s339 = scalar_lea.vmem [#allocation9], %s338
        // Predicated region
        $region37: #{tpu_custom_call.1} parent=27 // pred_check
          %p340 = pneg %p99
        $region38: #{tpu_custom_call.1} parent=27 // pred_check_branch
          %342 = sbr.rel (%p340) target = $region40
        $region39: #{tpu_custom_call.1} parent=27 // pred_region
          %s344 = ssub.s32 64, 64
          %345 = vsyncadd %s336, %s344
          %s346 = smul.addr %s27, 64
          %s347 = scalar_lea.hbm %s3, %s346
          %s349 = sshll.u32 %s339, 4
          %s350 = int_to_ptr.vmem [resolvable:$true] %s349
          %352 = dma.vmem_to_hbm [thread:$0]  %s350, 64, %s347, %s336
        $region40: #{tpu_custom_call.1} parent=27 // pred_fallthru
          _
      $region28: #{tpu_custom_call.1} parent=5 // pred_fallthru
        _
      %p353 = scmp.le.s32.totalorder 2, %s22
      // Predicated region
      $region41: #{tpu_custom_call.1} parent=5 // pred_check
        %p354 = pneg %p353
      $region42: #{tpu_custom_call.1} parent=5 // pred_check_branch
        %356 = sbr.rel (%p354) target = $region44
      $region43: #{tpu_custom_call.1} parent=5 // pred_region
        %s357 = ssub.s32 %s22, 2
        // Predicated region
        $region45: #{tpu_custom_call.1} parent=43 // pred_check
          %p358 = pneg %p105
        $region46: #{tpu_custom_call.1} parent=43 // pred_check_branch
          %360 = sbr.rel (%p358) target = $region48
        $region47: #{tpu_custom_call.1} parent=43 // pred_region
          %s361 = sand.u32 %s90, 1
          %s362 = scalar_lea.sflag [#allocation6], %s361
          %s363 = sand.u32 %s90, 1
          %s364 = smul.addr %s363, 4
          %s365 = scalar_lea.vmem [#allocation9], %s364
          %366 = dma.done %s362, 64
        $region48: #{tpu_custom_call.1} parent=43 // pred_fallthru
          _
      $region44: #{tpu_custom_call.1} parent=5 // pred_fallthru
        _
    $region6: #{tpu_custom_call.1} parent=1 // loop_footer
      %s26 = sadd.s32 1, %s22
    $region7: #{tpu_custom_call.1} parent=1 // loop_footer_branch
      %21 = sbr.rel target = $region3
    $region8: #{tpu_custom_call.1} parent=1 // loop_exit
      _
    %367 = vsyncpa [#allocation5], 1
    %s368 = scalar_lea.sflag [#allocation5], 1
    %369 = vsyncpa %s368, 1
    %370 = vsyncpa [#allocation8], 1
    %s371 = scalar_lea.sflag [#allocation8], 1
    %372 = vsyncpa %s371, 1
    %373 = vsyncpa [#allocation6], 1
    %s374 = scalar_lea.sflag [#allocation6], 1
    %375 = vsyncpa %s374, 1

</llo_original>
